<compile_context>
chip_gen: v7x
topology: tpu7x:2x2x1
jax: 0.10.0
libtpu: 0.0.40
codegen_flags: <defaults>
</compile_context>

<pallas_src>
import functools
from typing import NamedTuple

import numpy as np
import jax
import jax.numpy as jnp
from jax.experimental import pallas as pl
from jax.experimental.pallas import tpu as pltpu


class SocialPoolingParams(NamedTuple):
    num_rings: int
    num_wedges: int
    rmin: float
    rmax: float
    rmax_by_rmin: float
    hidden_size: int
    fc_config: tuple


def _round_up(x, m):
    return ((x + m - 1) // m) * m


# ------------------------- glue: ring_indices (torch.no_grad block) -------------------------
def ring_indices_jax(ydash, params: SocialPoolingParams):
    """Log-polar bin index for every (agent_i, agent_j) pair.  Mirrors the PyTorch code exactly."""
    num_rings = params.num_rings
    num_wedges = params.num_wedges
    r = jnp.sqrt(jnp.sum((ydash[:, None, :] - ydash[None, :, :]) ** 2, axis=2))
    ring_ids_f = jnp.ceil((num_rings - 1) * (jnp.log(r / params.rmin) / params.rmax_by_rmin))
    ring_ids_f = jnp.where(jnp.isneginf(ring_ids_f), 0.0, ring_ids_f)
    ring_ids = ring_ids_f.astype(jnp.int32)
    # torch: x_diff[i, j] = ydash[j, 0] - ydash[i, 0]
    x_diff = ydash[None, :, 0] - ydash[:, None, 0]
    y_diff = ydash[None, :, 1] - ydash[:, None, 1]
    theta = jnp.arctan2(y_diff, x_diff)
    wedge_ids_f = theta * num_wedges / (2.0 * np.pi)
    # torch .long() truncates toward zero; float->int convert in XLA does the same
    wedge_ids = (wedge_ids_f + (num_wedges // 2 - 1)).astype(jnp.int32)
    final_index = ring_ids * num_wedges + wedge_ids
    final_index = jnp.where(final_index < num_wedges, 0, final_index)
    final_index = jnp.where(final_index >= num_wedges ** 2, 0, final_index)
    return final_index.astype(jnp.int32)


# ------------------------- Pallas kernel: scatter_mean + Linear + ReLU -------------------------
def _social_pool_kernel(idx_ref, sel_ref, selT_ref, p_ref, b_ref, out_ref, *,
                        num_wedges, num_active):
    """
    idx_ref  : (TM, Np)        int32     pool indices, values in {0} U [num_wedges, num_wedges**2)
    sel_ref  : (K*Np, 128)     bfloat16  sel[k*Np+j, k] = 1        (count selector)
    selT_ref : (128, K*Np)     bfloat16  selT[k, k*Np+j] = 1       (1/count broadcaster)
    p_ref    : (K*Np, FP)      bfloat16  P[k*Np+j, :] = hidden[j] @ W_k   (zero-padded to FP lanes)
    b_ref    : (1, FP)         float32   padded bias
    out_ref  : (TM, FP)        float32

    out[i] = relu( bias + sum_k mean_{j in bucket k of i}( hidden[j] ) @ W_k )
    Bucket indices < num_wedges are dropped; buckets >= num_wedges**2 never occur (clamped to 0
    by ring_indices), so only K = num_wedges**2 - num_wedges buckets are active.
    """
    idx = idx_ref[...]                                                      # (TM, Np) int32

    # membership masks, side-by-side along lanes: M[i, k*Np + j] = (idx[i, j] == num_wedges + k)
    M = jnp.concatenate(
        [(idx == (num_wedges + k)).astype(jnp.bfloat16) for k in range(num_active)],
        axis=1)                                                             # (TM, K*Np) bf16

    # per-(row, bucket) member counts on the MXU (keeps the XLU idle)
    counts = jnp.dot(M, sel_ref[...], preferred_element_type=jnp.float32)   # (TM, 128) f32, exact
    inv = 1.0 / jnp.maximum(counts, 1.0)                                    # scatter_mean: empty -> 0
    # broadcast 1/count back over each bucket's Np columns, again via MXU
    inv_cols = jnp.dot(inv.astype(jnp.bfloat16), selT_ref[...],
                       preferred_element_type=jnp.float32)                  # (TM, K*Np)
    M_scaled = M * inv_cols.astype(jnp.bfloat16)                            # mask * 1/count (bf16)

    # single big contraction over (bucket, neighbor): fused scatter_mean + Linear
    acc = jnp.dot(M_scaled, p_ref[...], preferred_element_type=jnp.float32) # (TM, FP)
    acc = acc + b_ref[...]
    out_ref[...] = jnp.maximum(acc, 0.0)                                    # ReLU


def social_pool_forward(y_pred, x_start, hidden, fc_weight, fc_bias,
                        params: SocialPoolingParams, seq_start_end=None):
    """Equivalent of SocialPool.forward.  fc_weight is the PyTorch-layout (F_out, F_in) matrix."""
    del x_start  # only used for .device in the PyTorch code
    N = y_pred.shape[0]
    H = hidden.shape[1]

    # scatter_hidden hardcodes 48 => hidden_size must be 48; the flatten requires rings == wedges
    assert params.num_rings == params.num_wedges
    assert H == 48 == params.hidden_size

    K = params.num_wedges ** 2 - params.num_wedges       # buckets that can actually be non-empty
    F_out = fc_bias.shape[0]
    FP = _round_up(max(F_out, 128), 128)                 # lane-dense padded output width

    # ---- all segments in ONE pallas_call: cross-segment pairs -> bucket 0 (always dropped) ----
    if seq_start_end is None:
        seq_start_end = ((0, N),)
    seg = -(np.arange(N, dtype=np.int32) + 1)            # unique neg ids: uncovered agents pool alone
    for s, (start, end) in enumerate(seq_start_end):
        seg[int(start):int(end)] = s
    seg = jnp.asarray(seg)

    idx = ring_indices_jax(y_pred, params)               # pairwise => segment-local == global
    same_seg = seg[:, None] == seg[None, :]
    idx = jnp.where(same_seg, idx, 0)

    # ---- row tiling / padding (TM rows of queries per grid step) ----
    TM = 128 if N >= 128 else _round_up(N, 8)
    Np = _round_up(N, TM)
    idx = jnp.pad(idx, ((0, Np - N), (0, Np - N)))       # pad with 0 (a dropped bucket)
    hid = jnp.pad(hidden.astype(jnp.float32), ((0, Np - N), (0, 0)))
    # TODO(synk): for very large N the (TM, K*N) in-kernel mask needs a second (accumulating)
    #             grid axis over the neighbor dimension; not needed at these sizes.

    # ---- P[k*Np + j, :] = hidden[j] @ W_k  (dense matmul, done once in the wrapper) ----
    # W rows for buckets >= num_wedges**2 (always empty) are never touched, matching scatter_hidden.
    w_t = fc_weight.T.astype(jnp.float32)                # (F_in, F_out)
    w3 = w_t[: K * H, :].reshape(K, H, F_out)            # (K, H, F_out)
    P = jnp.einsum('jh,khf->kjf', hid, w3).reshape(K * Np, F_out)
    P = jnp.pad(P, ((0, 0), (0, FP - F_out))).astype(jnp.bfloat16)

    # ---- tiny constant selector matrices (counts / reciprocal broadcast on the MXU) ----
    KP = 128
    r = np.arange(K * Np)
    sel_np = np.zeros((K * Np, KP), np.float32)
    sel_np[r, r // Np] = 1.0
    selT_np = np.zeros((KP, K * Np), np.float32)
    selT_np[r // Np, r] = 1.0
    sel = jnp.asarray(sel_np, dtype=jnp.bfloat16)
    selT = jnp.asarray(selT_np, dtype=jnp.bfloat16)

    bias = jnp.pad(fc_bias.astype(jnp.float32), (0, FP - F_out)).reshape(1, FP)

    kernel = functools.partial(_social_pool_kernel,
                               num_wedges=params.num_wedges, num_active=K)
    out = pl.pallas_call(
        kernel,
        out_shape=jax.ShapeDtypeStruct((Np, FP), jnp.float32),
        grid=(Np // TM,),
        in_specs=[
            pl.BlockSpec((TM, Np), lambda i: (i, 0)),         # idx row tile
            pl.BlockSpec((K * Np, KP), lambda i: (0, 0)),     # sel   (resident)
            pl.BlockSpec((KP, K * Np), lambda i: (0, 0)),     # selT  (resident)
            pl.BlockSpec((K * Np, FP), lambda i: (0, 0)),     # P     (resident)
            pl.BlockSpec((1, FP), lambda i: (0, 0)),          # bias  (resident)
        ],
        out_specs=pl.BlockSpec((TM, FP), lambda i: (i, 0)),
        compiler_params=pltpu.CompilerParams(
            dimension_semantics=("parallel",),                # 2x on v7x (2 TCs); no-op on v5e/v6e
            vmem_limit_bytes=32 * 1024 * 1024,
        ),
    )(idx, sel, selT, P, bias)

    return out[:N, :F_out]


# ------------------------- pure-JAX reference (for a sanity check) -------------------------
def reference_forward(y_pred, hidden, fc_weight, fc_bias, params: SocialPoolingParams,
                      seq_start_end=None):
    n, h = hidden.shape
    if seq_start_end is None:
        seq_start_end = ((0, n),)
    dim_size = (params.num_wedges + 1) * params.num_rings
    pooled_all = jnp.zeros((n, fc_weight.shape[1]), jnp.float32)
    for (start, end) in seq_start_end:
        idx = ring_indices_jax(y_pred[start:end], params)
        onehot = (idx[:, :, None] == jnp.arange(dim_size)[None, None, :]).astype(jnp.float32)
        sums = jnp.einsum('ijb,jh->ibh', onehot, hidden[start:end].astype(jnp.float32))
        counts = jnp.sum(onehot, axis=1)
        mean = sums / jnp.maximum(counts, 1.0)[:, :, None]
        pooled = mean[:, params.num_wedges:, :].reshape(end - start, -1)
        pooled_all = pooled_all.at[start:end].set(pooled)
    return jax.nn.relu(pooled_all @ fc_weight.T.astype(jnp.float32) + fc_bias.astype(jnp.float32))


if __name__ == "__main__":
    # small, deterministic config implied by the module:
    #   num_rings == num_wedges (needed for the flatten), hidden_size == 48 (hardcoded in scatter_hidden)
    num_rings = num_wedges = 4
    hidden_size = 48
    rmin, rmax = 0.5, 4.0
    f_in = num_rings * num_wedges * hidden_size      # 768
    f_out = 64
    params = SocialPoolingParams(
        num_rings=num_rings, num_wedges=num_wedges,
        rmin=rmin, rmax=rmax, rmax_by_rmin=float(np.log(rmax / rmin)),
        hidden_size=hidden_size, fc_config=(f_in, f_out),
    )

    key = jax.random.PRNGKey(0)
    k1, k2, k3, k4 = jax.random.split(key, 4)
    N = 8
    y_pred = jax.random.normal(k1, (N, 2), dtype=jnp.float32) * 2.0
    x_start = jnp.zeros((N, 2), dtype=jnp.float32)
    hidden = jax.random.normal(k2, (N, hidden_size), dtype=jnp.float32)
    # deterministic in-script "init" of nn.Linear(f_in, f_out): weight (F_out, F_in), bias (F_out,)
    fc_weight = jax.random.normal(k3, (f_out, f_in), dtype=jnp.float32) * 0.02
    fc_bias = jax.random.normal(k4, (f_out,), dtype=jnp.float32) * 0.1

    # test 1: default single segment
    out = social_pool_forward(y_pred, x_start, hidden, fc_weight, fc_bias, params)
    out = jax.block_until_ready(out)
    ref = reference_forward(y_pred, hidden, fc_weight, fc_bias, params)
    np.testing.assert_allclose(np.asarray(out), np.asarray(ref), atol=2e-2, rtol=2e-2)

    # test 2: two segments fused into one pallas_call
    sse = ((0, 5), (5, 8))
    out2 = social_pool_forward(y_pred, x_start, hidden, fc_weight, fc_bias, params, sse)
    out2 = jax.block_until_ready(out2)
    ref2 = reference_forward(y_pred, hidden, fc_weight, fc_bias, params, sse)
    np.testing.assert_allclose(np.asarray(out2), np.asarray(ref2), atol=2e-2, rtol=2e-2)

    print("KERNEL_OK")
</pallas_src>

<mosaic_0001>
module attributes {stable_mosaic.version = 11 : i64} {
  func.func @_social_pool_kernel(%arg0: i32, %arg1: memref<8x8xi32, #tpu.memory_space<vmem>>, %arg2: memref<96x128xbf16, #tpu.memory_space<vmem>>, %arg3: memref<128x96xbf16, #tpu.memory_space<vmem>>, %arg4: memref<96x128xbf16, #tpu.memory_space<vmem>>, %arg5: memref<1x128xf32, #tpu.memory_space<vmem>>, %arg6: memref<8x128xf32, #tpu.memory_space<vmem>>) attributes {dimension_semantics = [#tpu.dimension_semantics<parallel>], iteration_bounds = array<i64: 1>, scalar_prefetch = 0 : i64, scratch_operands = 0 : i64, tpu.core_type = #tpu.core_type<tc>, window_params = [{transform_indices = @transform_0, window_bounds = array<i64: 8, 8>}, {pipeline_mode = #tpu.pipeline_mode<synchronous>, transform_indices = @transform_1, window_bounds = array<i64: 96, 128>}, {pipeline_mode = #tpu.pipeline_mode<synchronous>, transform_indices = @transform_2, window_bounds = array<i64: 128, 96>}, {pipeline_mode = #tpu.pipeline_mode<synchronous>, transform_indices = @transform_3, window_bounds = array<i64: 96, 128>}, {pipeline_mode = #tpu.pipeline_mode<synchronous>, transform_indices = @transform_4, window_bounds = array<i64: 1, 128>}, {transform_indices = @transform_5, window_bounds = array<i64: 8, 128>}]} {
    %c0 = arith.constant 0 : index
    %c0_0 = arith.constant 0 : index
    %0 = vector.load %arg1[%c0, %c0_0] : memref<8x8xi32, #tpu.memory_space<vmem>>, vector<8x8xi32>
    %c4_i32 = arith.constant 4 : i32
    %1 = vector.broadcast %c4_i32 : i32 to vector<8x8xi32>
    %2 = arith.cmpi eq, %0, %1 : vector<8x8xi32>
    %3 = arith.extui %2 : vector<8x8xi1> to vector<8x8xi32>
    %4 = arith.sitofp %3 : vector<8x8xi32> to vector<8x8xf32>
    %5 = arith.truncf %4 : vector<8x8xf32> to vector<8x8xbf16>
    %c5_i32 = arith.constant 5 : i32
    %6 = vector.broadcast %c5_i32 : i32 to vector<8x8xi32>
    %7 = arith.cmpi eq, %0, %6 : vector<8x8xi32>
    %8 = arith.extui %7 : vector<8x8xi1> to vector<8x8xi32>
    %9 = arith.sitofp %8 : vector<8x8xi32> to vector<8x8xf32>
    %10 = arith.truncf %9 : vector<8x8xf32> to vector<8x8xbf16>
    %c6_i32 = arith.constant 6 : i32
    %11 = vector.broadcast %c6_i32 : i32 to vector<8x8xi32>
    %12 = arith.cmpi eq, %0, %11 : vector<8x8xi32>
    %13 = arith.extui %12 : vector<8x8xi1> to vector<8x8xi32>
    %14 = arith.sitofp %13 : vector<8x8xi32> to vector<8x8xf32>
    %15 = arith.truncf %14 : vector<8x8xf32> to vector<8x8xbf16>
    %c7_i32 = arith.constant 7 : i32
    %16 = vector.broadcast %c7_i32 : i32 to vector<8x8xi32>
    %17 = arith.cmpi eq, %0, %16 : vector<8x8xi32>
    %18 = arith.extui %17 : vector<8x8xi1> to vector<8x8xi32>
    %19 = arith.sitofp %18 : vector<8x8xi32> to vector<8x8xf32>
    %20 = arith.truncf %19 : vector<8x8xf32> to vector<8x8xbf16>
    %c8_i32 = arith.constant 8 : i32
    %21 = vector.broadcast %c8_i32 : i32 to vector<8x8xi32>
    %22 = arith.cmpi eq, %0, %21 : vector<8x8xi32>
    %23 = arith.extui %22 : vector<8x8xi1> to vector<8x8xi32>
    %24 = arith.sitofp %23 : vector<8x8xi32> to vector<8x8xf32>
    %25 = arith.truncf %24 : vector<8x8xf32> to vector<8x8xbf16>
    %c9_i32 = arith.constant 9 : i32
    %26 = vector.broadcast %c9_i32 : i32 to vector<8x8xi32>
    %27 = arith.cmpi eq, %0, %26 : vector<8x8xi32>
    %28 = arith.extui %27 : vector<8x8xi1> to vector<8x8xi32>
    %29 = arith.sitofp %28 : vector<8x8xi32> to vector<8x8xf32>
    %30 = arith.truncf %29 : vector<8x8xf32> to vector<8x8xbf16>
    %c10_i32 = arith.constant 10 : i32
    %31 = vector.broadcast %c10_i32 : i32 to vector<8x8xi32>
    %32 = arith.cmpi eq, %0, %31 : vector<8x8xi32>
    %33 = arith.extui %32 : vector<8x8xi1> to vector<8x8xi32>
    %34 = arith.sitofp %33 : vector<8x8xi32> to vector<8x8xf32>
    %35 = arith.truncf %34 : vector<8x8xf32> to vector<8x8xbf16>
    %c11_i32 = arith.constant 11 : i32
    %36 = vector.broadcast %c11_i32 : i32 to vector<8x8xi32>
    %37 = arith.cmpi eq, %0, %36 : vector<8x8xi32>
    %38 = arith.extui %37 : vector<8x8xi1> to vector<8x8xi32>
    %39 = arith.sitofp %38 : vector<8x8xi32> to vector<8x8xf32>
    %40 = arith.truncf %39 : vector<8x8xf32> to vector<8x8xbf16>
    %c12_i32 = arith.constant 12 : i32
    %41 = vector.broadcast %c12_i32 : i32 to vector<8x8xi32>
    %42 = arith.cmpi eq, %0, %41 : vector<8x8xi32>
    %43 = arith.extui %42 : vector<8x8xi1> to vector<8x8xi32>
    %44 = arith.sitofp %43 : vector<8x8xi32> to vector<8x8xf32>
    %45 = arith.truncf %44 : vector<8x8xf32> to vector<8x8xbf16>
    %c13_i32 = arith.constant 13 : i32
    %46 = vector.broadcast %c13_i32 : i32 to vector<8x8xi32>
    %47 = arith.cmpi eq, %0, %46 : vector<8x8xi32>
    %48 = arith.extui %47 : vector<8x8xi1> to vector<8x8xi32>
    %49 = arith.sitofp %48 : vector<8x8xi32> to vector<8x8xf32>
    %50 = arith.truncf %49 : vector<8x8xf32> to vector<8x8xbf16>
    %c14_i32 = arith.constant 14 : i32
    %51 = vector.broadcast %c14_i32 : i32 to vector<8x8xi32>
    %52 = arith.cmpi eq, %0, %51 : vector<8x8xi32>
    %53 = arith.extui %52 : vector<8x8xi1> to vector<8x8xi32>
    %54 = arith.sitofp %53 : vector<8x8xi32> to vector<8x8xf32>
    %55 = arith.truncf %54 : vector<8x8xf32> to vector<8x8xbf16>
    %c15_i32 = arith.constant 15 : i32
    %56 = vector.broadcast %c15_i32 : i32 to vector<8x8xi32>
    %57 = arith.cmpi eq, %0, %56 : vector<8x8xi32>
    %58 = arith.extui %57 : vector<8x8xi1> to vector<8x8xi32>
    %59 = arith.sitofp %58 : vector<8x8xi32> to vector<8x8xf32>
    %60 = arith.truncf %59 : vector<8x8xf32> to vector<8x8xbf16>
    %61 = tpu.concatenate %5, %10, %15, %20, %25, %30, %35, %40, %45, %50, %55, %60 in 1 : vector<8x8xbf16>, vector<8x8xbf16>, vector<8x8xbf16>, vector<8x8xbf16>, vector<8x8xbf16>, vector<8x8xbf16>, vector<8x8xbf16>, vector<8x8xbf16>, vector<8x8xbf16>, vector<8x8xbf16>, vector<8x8xbf16>, vector<8x8xbf16> -> vector<8x96xbf16>
    %c0_1 = arith.constant 0 : index
    %c0_2 = arith.constant 0 : index
    %62 = vector.load %arg2[%c0_1, %c0_2] : memref<96x128xbf16, #tpu.memory_space<vmem>>, vector<96x128xbf16>
    %cst = arith.constant dense<0.000000e+00> : vector<8x128xf32>
    %63 = tpu.matmul %61, %62, %cst {dimension_numbers = #tpu.dot_dimension_numbers<[1], [0], [0], [1], [0, 0, 1, 1], [], []>} : vector<8x96xbf16>, vector<96x128xbf16>, vector<8x128xf32> -> vector<8x128xf32>
    %cst_3 = arith.constant 1.000000e+00 : f32
    %64 = vector.broadcast %cst_3 : f32 to vector<8x128xf32>
    %65 = arith.maximumf %63, %64 : vector<8x128xf32>
    %cst_4 = arith.constant 1.000000e+00 : f32
    %66 = vector.broadcast %cst_4 : f32 to vector<8x128xf32>
    %67 = arith.divf %66, %65 : vector<8x128xf32>
    %68 = arith.truncf %67 : vector<8x128xf32> to vector<8x128xbf16>
    %c0_5 = arith.constant 0 : index
    %c0_6 = arith.constant 0 : index
    %69 = vector.load %arg3[%c0_5, %c0_6] : memref<128x96xbf16, #tpu.memory_space<vmem>>, vector<128x96xbf16>
    %cst_7 = arith.constant dense<0.000000e+00> : vector<8x96xf32>
    %70 = tpu.matmul %68, %69, %cst_7 {dimension_numbers = #tpu.dot_dimension_numbers<[1], [0], [0], [1], [0, 0, 1, 1], [], []>} : vector<8x128xbf16>, vector<128x96xbf16>, vector<8x96xf32> -> vector<8x96xf32>
    %71 = arith.truncf %70 : vector<8x96xf32> to vector<8x96xbf16>
    %72 = arith.mulf %61, %71 : vector<8x96xbf16>
    %c0_8 = arith.constant 0 : index
    %c0_9 = arith.constant 0 : index
    %73 = vector.load %arg4[%c0_8, %c0_9] : memref<96x128xbf16, #tpu.memory_space<vmem>>, vector<96x128xbf16>
    %cst_10 = arith.constant dense<0.000000e+00> : vector<8x128xf32>
    %74 = tpu.matmul %72, %73, %cst_10 {dimension_numbers = #tpu.dot_dimension_numbers<[1], [0], [0], [1], [0, 0, 1, 1], [], []>} : vector<8x96xbf16>, vector<96x128xbf16>, vector<8x128xf32> -> vector<8x128xf32>
    %c0_11 = arith.constant 0 : index
    %c0_12 = arith.constant 0 : index
    %75 = vector.load %arg5[%c0_11, %c0_12] : memref<1x128xf32, #tpu.memory_space<vmem>>, vector<1x128xf32>
    %76 = vector.broadcast %75 : vector<1x128xf32> to vector<8x128xf32>
    %77 = arith.addf %74, %76 : vector<8x128xf32>
    %cst_13 = arith.constant 0.000000e+00 : f32
    %78 = vector.broadcast %cst_13 : f32 to vector<8x128xf32>
    %79 = arith.maximumf %77, %78 : vector<8x128xf32>
    %c0_14 = arith.constant 0 : index
    %c0_15 = arith.constant 0 : index
    %80 = vector.load %arg6[%c0_14, %c0_15] : memref<8x128xf32, #tpu.memory_space<vmem>>, vector<8x128xf32>
    tpu.vector_store %arg6[%c0_14, %c0_15], %79 {strides = array<i32>} : memref<8x128xf32, #tpu.memory_space<vmem>>, vector<8x128xf32>,
    return
  }
  func.func @transform_0(%arg0: i32) -> (i32, i32) {
    %c0_i32 = arith.constant 0 : i32
    %c0_i32_0 = arith.constant 0 : i32
    return %arg0, %c0_i32 : i32, i32
  }
  func.func @transform_1(%arg0: i32) -> (i32, i32) {
    %c0_i32 = arith.constant 0 : i32
    %c0_i32_0 = arith.constant 0 : i32
    %c0_i32_1 = arith.constant 0 : i32
    return %c0_i32, %c0_i32_0 : i32, i32
  }
  func.func @transform_2(%arg0: i32) -> (i32, i32) {
    %c0_i32 = arith.constant 0 : i32
    %c0_i32_0 = arith.constant 0 : i32
    %c0_i32_1 = arith.constant 0 : i32
    return %c0_i32, %c0_i32_0 : i32, i32
  }
  func.func @transform_3(%arg0: i32) -> (i32, i32) {
    %c0_i32 = arith.constant 0 : i32
    %c0_i32_0 = arith.constant 0 : i32
    %c0_i32_1 = arith.constant 0 : i32
    return %c0_i32, %c0_i32_0 : i32, i32
  }
  func.func @transform_4(%arg0: i32) -> (i32, i32) {
    %c0_i32 = arith.constant 0 : i32
    %c0_i32_0 = arith.constant 0 : i32
    %c0_i32_1 = arith.constant 0 : i32
    return %c0_i32, %c0_i32_0 : i32, i32
  }
  func.func @transform_5(%arg0: i32) -> (i32, i32) {
    %c0_i32 = arith.constant 0 : i32
    %c0_i32_0 = arith.constant 0 : i32
    return %arg0, %c0_i32 : i32, i32
  }
}

</mosaic_0001>

<llo_original>
// kernel: tpu_custom_call.1
$region0: #{tpu_custom_call.1}
  #allocation0 [shape = 'u32[]', space=smem, size = 0x4, offset = 0x4, fixed_abs, tag = 'smem constant byte address 0x4 - core index']
  #allocation1 [shape = 'u32[144,128]{1,0:T(1,128)}', space=vmem, size = 0x12000, scoped, tag = 'internal scratch']
  %s0 = inlined_call_operand.vmem [shape: s32[8,8], index: 0, kind: input, shape index: {}]
  %s1 = inlined_call_operand.vmem [shape: bf16[96,128], index: 1, kind: input, shape index: {}]
  %s2 = inlined_call_operand.vmem [shape: bf16[128,96], index: 2, kind: input, shape index: {}]
  %s3 = inlined_call_operand.vmem [shape: bf16[96,128], index: 3, kind: input, shape index: {}]
  %s4 = inlined_call_operand.vmem [shape: f32[1,128], index: 4, kind: input, shape index: {}]
  %s5 = inlined_call_operand.hbm [shape: f32[8,128], index: 5, kind: output, shape index: {}]
  %s6 = sld [smem:[#allocation0]]
  $region30: #{tpu_custom_call.1} parent=0
    _
  %s8 = ssub.s32 1, %s6
  %s9 = scalar_select 0, %s8, %s6
  $region1: #{tpu_custom_call.1} parent=0
    #allocation2 [shape = 'u8[4096]{0}', space=vmem, size = 0x1000, scoped, tag = 'output window, operand 0, single buffered']
    #allocation3 [shape = 's32[1]{0}', space=sflag, size = 0x4, scoped, tag = 'scoped memory for tpu_custom_call.1']
    %10 = vsyncpa [#allocation3], 0
    // Predicated region
    $region2: #{tpu_custom_call.1} parent=1 // pred_check
      _
    $region3: #{tpu_custom_call.1} parent=1 // pred_check_branch
      %12 = sbr.rel (0) target = $region5
    $region4: #{tpu_custom_call.1} parent=1 // pred_region
      _
    $region5: #{tpu_custom_call.1} parent=1 // pred_fallthru
      _
    // Predicated region
    $region6: #{tpu_custom_call.1} parent=1 // pred_check
      _
    $region7: #{tpu_custom_call.1} parent=1 // pred_check_branch
      %14 = sbr.rel (0) target = $region9
    $region8: #{tpu_custom_call.1} parent=1 // pred_region
      _
    $region9: #{tpu_custom_call.1} parent=1 // pred_fallthru
      _
    // Predicated region
    $region10: #{tpu_custom_call.1} parent=1 // pred_check
      _
    $region11: #{tpu_custom_call.1} parent=1 // pred_check_branch
      %16 = sbr.rel (0) target = $region13
    $region12: #{tpu_custom_call.1} parent=1 // pred_region
      _
    $region13: #{tpu_custom_call.1} parent=1 // pred_fallthru
      _
    // Predicated region
    $region14: #{tpu_custom_call.1} parent=1 // pred_check
      _
    $region15: #{tpu_custom_call.1} parent=1 // pred_check_branch
      %18 = sbr.rel (0) target = $region17
    $region16: #{tpu_custom_call.1} parent=1 // pred_region
      _
    $region17: #{tpu_custom_call.1} parent=1 // pred_fallthru
      _
    // Predicated region
    $region18: #{tpu_custom_call.1} parent=1 // pred_check
      _
    $region19: #{tpu_custom_call.1} parent=1 // pred_check_branch
      %20 = sbr.rel (0) target = $region21
    $region20: #{tpu_custom_call.1} parent=1 // pred_region
      _
    $region21: #{tpu_custom_call.1} parent=1 // pred_fallthru
      _
    %v22 = vld [vmem:[%s0] sm:$0xff]
    %vm23 = vcmp.eq.s32.totalorder %v22, 4
    %v24 = vsel %vm23, 1, 0
    %v25 = vcvt.s32.f32 %v24
    %v26 = vpack.c.bf16 %v25, %v25
    %vm27 = vcmp.eq.s32.totalorder %v22, 5
    %v28 = vsel %vm27, 1, 0
    %v29 = vcvt.s32.f32 %v28
    %v30 = vpack.c.bf16 %v29, %v29
    %vm31 = vcmp.eq.s32.totalorder %v22, 6
    %v32 = vsel %vm31, 1, 0
    %v33 = vcvt.s32.f32 %v32
    %v34 = vpack.c.bf16 %v33, %v33
    %vm35 = vcmp.eq.s32.totalorder %v22, 7
    %v36 = vsel %vm35, 1, 0
    %v37 = vcvt.s32.f32 %v36
    %v38 = vpack.c.bf16 %v37, %v37
    %vm39 = vcmp.eq.s32.totalorder %v22, 8
    %v40 = vsel %vm39, 1, 0
    %v41 = vcvt.s32.f32 %v40
    %v42 = vpack.c.bf16 %v41, %v41
    %vm43 = vcmp.eq.s32.totalorder %v22, 9
    %v44 = vsel %vm43, 1, 0
    %v45 = vcvt.s32.f32 %v44
    %v46 = vpack.c.bf16 %v45, %v45
    %vm47 = vcmp.eq.s32.totalorder %v22, 10
    %v48 = vsel %vm47, 1, 0
    %v49 = vcvt.s32.f32 %v48
    %v50 = vpack.c.bf16 %v49, %v49
    %vm51 = vcmp.eq.s32.totalorder %v22, 11
    %v52 = vsel %vm51, 1, 0
    %v53 = vcvt.s32.f32 %v52
    %v54 = vpack.c.bf16 %v53, %v53
    %vm55 = vcmp.eq.s32.totalorder %v22, 12
    %v56 = vsel %vm55, 1, 0
    %v57 = vcvt.s32.f32 %v56
    %v58 = vpack.c.bf16 %v57, %v57
    %vm59 = vcmp.eq.s32.totalorder %v22, 13
    %v60 = vsel %vm59, 1, 0
    %v61 = vcvt.s32.f32 %v60
    %v62 = vpack.c.bf16 %v61, %v61
    %vm63 = vcmp.eq.s32.totalorder %v22, 14
    %v64 = vsel %vm63, 1, 0
    %v65 = vcvt.s32.f32 %v64
    %v66 = vpack.c.bf16 %v65, %v65
    %vm67 = vcmp.eq.s32.totalorder %v22, 15
    %v68 = vsel %vm67, 1, 0
    %v69 = vcvt.s32.f32 %v68
    %v70 = vpack.c.bf16 %v69, %v69
    %72 = vrot.lane.b32.xlu0 %v30, 8
    %v73 = vpop.permute.xlu0 %72
    %75 = vrot.lane.b32.xlu0 %v34, 16
    %v76 = vpop.permute.xlu0 %75
    %78 = vrot.lane.b32.xlu0 %v38, 24
    %v79 = vpop.permute.xlu0 %78
    %81 = vrot.lane.b32.xlu0 %v42, 32
    %v82 = vpop.permute.xlu0 %81
    %84 = vrot.lane.b32.xlu0 %v46, 40
    %v85 = vpop.permute.xlu0 %84
    %87 = vrot.lane.b32.xlu0 %v50, 48
    %v88 = vpop.permute.xlu0 %87
    %90 = vrot.lane.b32.xlu0 %v54, 56
    %v91 = vpop.permute.xlu0 %90
    %93 = vrot.lane.b32.xlu0 %v58, 64
    %v94 = vpop.permute.xlu0 %93
    %96 = vrot.lane.b32.xlu0 %v62, 72
    %v97 = vpop.permute.xlu0 %96
    %99 = vrot.lane.b32.xlu0 %v66, 80
    %v100 = vpop.permute.xlu0 %99
    %102 = vrot.lane.b32.xlu0 %v70, 88
    %v103 = vpop.permute.xlu0 %102
    %vm104 = vcmask 64512
    %v107 = vsel %vm104, %v26, %v73
    %vm108 = vcmask 130048
    %v110 = vsel %vm108, %v107, %v76
    %vm111 = vcmask 195584
    %v113 = vsel %vm111, %v110, %v79
    %vm114 = vcmask 261120
    %v116 = vsel %vm114, %v113, %v82
    %vm117 = vcmask 326656
    %v119 = vsel %vm117, %v116, %v85
    %vm120 = vcmask 392192
    %v122 = vsel %vm120, %v119, %v88
    %vm123 = vcmask 457728
    %v125 = vsel %vm123, %v122, %v91
    %vm126 = vcmask 523264
    %v128 = vsel %vm126, %v125, %v94
    %vm129 = vcmask 588800
    %v131 = vsel %vm129, %v128, %v97
    %vm132 = vcmask 654336
    %v134 = vsel %vm132, %v131, %v100
    %vm135 = vcmask 719872
    %v137 = vsel %vm135, %v134, %v103
    %v139 = vld [vmem:[%s1] sm:$0xf]
    %v140 = vld [vmem:[%s1 + $0x4] sm:$0xf]
    %v141 = vld [vmem:[%s1 + $0x8] sm:$0xf]
    %v142 = vld [vmem:[%s1 + $0xc] sm:$0xf]
    %v143 = vld [vmem:[%s1 + $0x10] sm:$0xf]
    %v144 = vld [vmem:[%s1 + $0x14] sm:$0xf]
    %v145 = vld [vmem:[%s1 + $0x18] sm:$0xf]
    %v146 = vld [vmem:[%s1 + $0x1c] sm:$0xf]
    %v147 = vld [vmem:[%s1 + $0x20] sm:$0xf]
    %v148 = vld [vmem:[%s1 + $0x24] sm:$0xf]
    %v149 = vld [vmem:[%s1 + $0x28] sm:$0xf]
    %v150 = vld [vmem:[%s1 + $0x2c] sm:$0xf]
    %v163 = vunpack.c.l.b16 %v139
    %v164 = vunpack.c.l.b16 %v140
    %v165 = vunpack.c.l.b16 %v141
    %v166 = vunpack.c.l.b16 %v142
    %v167 = vunpack.c.l.b16 %v143
    %v168 = vunpack.c.l.b16 %v144
    %v169 = vunpack.c.l.b16 %v145
    %v170 = vunpack.c.l.b16 %v146
    %v171 = vunpack.c.l.b16 %v147
    %v172 = vunpack.c.l.b16 %v148
    %v173 = vunpack.c.l.b16 %v149
    %v174 = vunpack.c.l.b16 %v150
    %v175 = vpack.c.b16 %v164, %v163
    %v176 = vpack.c.b16 %v166, %v165
    %v177 = vpack.c.b16 %v168, %v167
    %v178 = vpack.c.b16 %v170, %v169
    %v179 = vpack.c.b16 %v172, %v171
    %v180 = vpack.c.b16 %v174, %v173
    %vm187 = vcmask 785408
    %v188 = vsel %vm187, %v137, 0
    %190 = vmatprep.subr.bf16.mxu0 0
    %191 = vmatpush1.bf16.msra.mxu0 %v175
    %192 = vmatprep.subr.bf16.mxu0 0
    %193 = vmatpush1.bf16.msra.mxu0 %v176
    %194 = vmatprep.subr.bf16.mxu0 0
    %195 = vmatpush1.bf16.msra.mxu0 %v177
    %196 = vmatprep.subr.bf16.mxu0 0
    %197 = vmatpush1.bf16.msra.mxu0 %v178
    %198 = vmatprep.subr.bf16.mxu0 0
    %199 = vmatpush1.bf16.msra.mxu0 %v179
    %200 = vmatprep.subr.bf16.mxu0 0
    %201 = vmatpush1.bf16.msra.mxu0 %v180
    %202 = vmatprep.subr.bf16.mxu0 0
    %203 = vmatpush1.bf16.msra.mxu0 0
    %204 = vmatprep.subr.bf16.mxu0 0
    %205 = vmatpush1.bf16.msra.mxu0 0
    %206 = vmatprep.subr.bf16.mxu0 0
    %207 = vmatpush1.bf16.msra.mxu0 0
    %208 = vmatprep.subr.bf16.mxu0 0
    %209 = vmatpush1.bf16.msra.mxu0 0
    %210 = vmatprep.subr.bf16.mxu0 0
    %211 = vmatpush1.bf16.msra.mxu0 0
    %212 = vmatprep.subr.bf16.mxu0 0
    %213 = vmatpush1.bf16.msra.mxu0 0
    %214 = vmatprep.subr.bf16.mxu0 0
    %215 = vmatpush1.bf16.msra.mxu0 0
    %216 = vmatprep.subr.bf16.mxu0 0
    %217 = vmatpush1.bf16.msra.mxu0 0
    %218 = vmatprep.subr.bf16.mxu0 0
    %219 = vmatpush1.bf16.msra.mxu0 0
    %220 = vmatprep.subr.bf16.mxu0 0
    %221 = vmatpush1.bf16.msra.mxu0 0
    %222 = vmatprep.mubr.bf16.mxu0 0
    %223 = vmatmul.mubr.bf16.gmra.mrb[0].mxu0 %v188
    %v224 = vpop.f32.mrb[0].mxu0
    %v225 = vadd.f32 0.0, %v224
    %v226 = vpop.f32.mrb[0].mxu0
    %v227 = vpop.f32.mrb[0].mxu0
    %v228 = vpop.f32.mrb[0].mxu0
    %229 = vdwg.mxu0
    %v230 = vmax.f32 %v225, 1.0
    %v231 = vrcp.pop %v230
    %v232 = vmul.f32 1.0, %v231
    %v233 = vpack.c.bf16 %v232, %v232
    %v234 = vld [vmem:[%s2] sm:$0xf]
    %v235 = vld [vmem:[%s2 + $0x4] sm:$0xf]
    %v236 = vld [vmem:[%s2 + $0x8] sm:$0xf]
    %v237 = vld [vmem:[%s2 + $0xc] sm:$0xf]
    %v238 = vld [vmem:[%s2 + $0x10] sm:$0xf]
    %v239 = vld [vmem:[%s2 + $0x14] sm:$0xf]
    %v240 = vld [vmem:[%s2 + $0x18] sm:$0xf]
    %v241 = vld [vmem:[%s2 + $0x1c] sm:$0xf]
    %v242 = vld [vmem:[%s2 + $0x20] sm:$0xf]
    %v243 = vld [vmem:[%s2 + $0x24] sm:$0xf]
    %v244 = vld [vmem:[%s2 + $0x28] sm:$0xf]
    %v245 = vld [vmem:[%s2 + $0x2c] sm:$0xf]
    %v246 = vld [vmem:[%s2 + $0x30] sm:$0xf]
    %v247 = vld [vmem:[%s2 + $0x34] sm:$0xf]
    %v248 = vld [vmem:[%s2 + $0x38] sm:$0xf]
    %v249 = vld [vmem:[%s2 + $0x3c] sm:$0xf]
    %v266 = vunpack.c.l.b16 %v234
    %v267 = vunpack.c.l.b16 %v235
    %v268 = vunpack.c.l.b16 %v236
    %v269 = vunpack.c.l.b16 %v237
    %v270 = vunpack.c.l.b16 %v238
    %v271 = vunpack.c.l.b16 %v239
    %v272 = vunpack.c.l.b16 %v240
    %v273 = vunpack.c.l.b16 %v241
    %v274 = vunpack.c.l.b16 %v242
    %v275 = vunpack.c.l.b16 %v243
    %v276 = vunpack.c.l.b16 %v244
    %v277 = vunpack.c.l.b16 %v245
    %v278 = vunpack.c.l.b16 %v246
    %v279 = vunpack.c.l.b16 %v247
    %v280 = vunpack.c.l.b16 %v248
    %v281 = vunpack.c.l.b16 %v249
    %v282 = vpack.c.b16 %v267, %v266
    %v283 = vpack.c.b16 %v269, %v268
    %v284 = vpack.c.b16 %v271, %v270
    %v285 = vpack.c.b16 %v273, %v272
    %v286 = vpack.c.b16 %v275, %v274
    %v287 = vpack.c.b16 %v277, %v276
    %v288 = vpack.c.b16 %v279, %v278
    %v289 = vpack.c.b16 %v281, %v280
    %298 = vmatprep.subr.bf16.mxu0 0
    %299 = vmatpush1.bf16.msra.mxu0 %v282
    %300 = vmatprep.subr.bf16.mxu0 0
    %301 = vmatpush1.bf16.msra.mxu0 %v283
    %302 = vmatprep.subr.bf16.mxu0 0
    %303 = vmatpush1.bf16.msra.mxu0 %v284
    %304 = vmatprep.subr.bf16.mxu0 0
    %305 = vmatpush1.bf16.msra.mxu0 %v285
    %306 = vmatprep.subr.bf16.mxu0 0
    %307 = vmatpush1.bf16.msra.mxu0 %v286
    %308 = vmatprep.subr.bf16.mxu0 0
    %309 = vmatpush1.bf16.msra.mxu0 %v287
    %310 = vmatprep.subr.bf16.mxu0 0
    %311 = vmatpush1.bf16.msra.mxu0 %v288
    %312 = vmatprep.subr.bf16.mxu0 0
    %313 = vmatpush1.bf16.msra.mxu0 %v289
    %314 = vmatprep.subr.bf16.mxu0 0
    %315 = vmatpush1.bf16.msra.mxu0 0
    %316 = vmatprep.subr.bf16.mxu0 0
    %317 = vmatpush1.bf16.msra.mxu0 0
    %318 = vmatprep.subr.bf16.mxu0 0
    %319 = vmatpush1.bf16.msra.mxu0 0
    %320 = vmatprep.subr.bf16.mxu0 0
    %321 = vmatpush1.bf16.msra.mxu0 0
    %322 = vmatprep.subr.bf16.mxu0 0
    %323 = vmatpush1.bf16.msra.mxu0 0
    %324 = vmatprep.subr.bf16.mxu0 0
    %325 = vmatpush1.bf16.msra.mxu0 0
    %326 = vmatprep.subr.bf16.mxu0 0
    %327 = vmatpush1.bf16.msra.mxu0 0
    %328 = vmatprep.subr.bf16.mxu0 0
    %329 = vmatpush1.bf16.msra.mxu0 0
    %330 = vmatprep.mubr.bf16.mxu0 0
    %331 = vmatmul.mubr.bf16.gmra.mrb[0].mxu0 %v233
    %v332 = vpop.f32.mrb[0].mxu0
    %v333 = vadd.f32 0.0, %v332
    %v334 = vpop.f32.mrb[0].mxu0
    %v335 = vpop.f32.mrb[0].mxu0
    %v336 = vpop.f32.mrb[0].mxu0
    %337 = vdwg.mxu0
    %v338 = vpack.c.bf16 %v333, %v333
    %v339 = vmul.bf16 %v137, %v338
    %v340 = vld [vmem:[%s3] sm:$0xf]
    %v341 = vld [vmem:[%s3 + $0x4] sm:$0xf]
    %v342 = vld [vmem:[%s3 + $0x8] sm:$0xf]
    %v343 = vld [vmem:[%s3 + $0xc] sm:$0xf]
    %v344 = vld [vmem:[%s3 + $0x10] sm:$0xf]
    %v345 = vld [vmem:[%s3 + $0x14] sm:$0xf]
    %v346 = vld [vmem:[%s3 + $0x18] sm:$0xf]
    %v347 = vld [vmem:[%s3 + $0x1c] sm:$0xf]
    %v348 = vld [vmem:[%s3 + $0x20] sm:$0xf]
    %v349 = vld [vmem:[%s3 + $0x24] sm:$0xf]
    %v350 = vld [vmem:[%s3 + $0x28] sm:$0xf]
    %v351 = vld [vmem:[%s3 + $0x2c] sm:$0xf]
    %v352 = vld [vmem:[%s4] sm:$0x1]
    %v354 = vlaneseq
    %v355 = vshrl.u32 %v354, 7
    %v356 = vsub.s32 0, %v355
    %v357 = vrot.slane %v352, %v356
    %v371 = vunpack.c.l.b16 %v340
    %v372 = vunpack.c.l.b16 %v341
    %v373 = vunpack.c.l.b16 %v342
    %v374 = vunpack.c.l.b16 %v343
    %v375 = vunpack.c.l.b16 %v344
    %v376 = vunpack.c.l.b16 %v345
    %v377 = vunpack.c.l.b16 %v346
    %v378 = vunpack.c.l.b16 %v347
    %v379 = vunpack.c.l.b16 %v348
    %v380 = vunpack.c.l.b16 %v349
    %v381 = vunpack.c.l.b16 %v350
    %v382 = vunpack.c.l.b16 %v351
    %v383 = vpack.c.b16 %v372, %v371
    %v384 = vpack.c.b16 %v374, %v373
    %v385 = vpack.c.b16 %v376, %v375
    %v386 = vpack.c.b16 %v378, %v377
    %v387 = vpack.c.b16 %v380, %v379
    %v388 = vpack.c.b16 %v382, %v381
    %v396 = vsel %vm187, %v339, 0
    %398 = vmatprep.subr.bf16.mxu0 0
    %399 = vmatpush1.bf16.msra.mxu0 %v383
    %400 = vmatprep.subr.bf16.mxu0 0
    %401 = vmatpush1.bf16.msra.mxu0 %v384
    %402 = vmatprep.subr.bf16.mxu0 0
    %403 = vmatpush1.bf16.msra.mxu0 %v385
    %404 = vmatprep.subr.bf16.mxu0 0
    %405 = vmatpush1.bf16.msra.mxu0 %v386
    %406 = vmatprep.subr.bf16.mxu0 0
    %407 = vmatpush1.bf16.msra.mxu0 %v387
    %408 = vmatprep.subr.bf16.mxu0 0
    %409 = vmatpush1.bf16.msra.mxu0 %v388
    %410 = vmatprep.subr.bf16.mxu0 0
    %411 = vmatpush1.bf16.msra.mxu0 0
    %412 = vmatprep.subr.bf16.mxu0 0
    %413 = vmatpush1.bf16.msra.mxu0 0
    %414 = vmatprep.subr.bf16.mxu0 0
    %415 = vmatpush1.bf16.msra.mxu0 0
    %416 = vmatprep.subr.bf16.mxu0 0
    %417 = vmatpush1.bf16.msra.mxu0 0
    %418 = vmatprep.subr.bf16.mxu0 0
    %419 = vmatpush1.bf16.msra.mxu0 0
    %420 = vmatprep.subr.bf16.mxu0 0
    %421 = vmatpush1.bf16.msra.mxu0 0
    %422 = vmatprep.subr.bf16.mxu0 0
    %423 = vmatpush1.bf16.msra.mxu0 0
    %424 = vmatprep.subr.bf16.mxu0 0
    %425 = vmatpush1.bf16.msra.mxu0 0
    %426 = vmatprep.subr.bf16.mxu0 0
    %427 = vmatpush1.bf16.msra.mxu0 0
    %428 = vmatprep.subr.bf16.mxu0 0
    %429 = vmatpush1.bf16.msra.mxu0 0
    %430 = vmatprep.mubr.bf16.mxu0 0
    %431 = vmatmul.mubr.bf16.gmra.mrb[0].mxu0 %v396
    %v432 = vpop.f32.mrb[0].mxu0
    %v433 = vadd.f32 %v357, %v432
    %v434 = vpop.f32.mrb[0].mxu0
    %v435 = vpop.f32.mrb[0].mxu0
    %v436 = vpop.f32.mrb[0].mxu0
    %437 = vdwg.mxu0
    %v438 = vmax.f32 %v433, 0.0
    %439 = vst [vmem:[#allocation2] sm:$0xff] %v438
    // Predicated region
    $region22: #{tpu_custom_call.1} parent=1 // pred_check
      _
    $region23: #{tpu_custom_call.1} parent=1 // pred_check_branch
      %441 = sbr.rel (0) target = $region25
    $region24: #{tpu_custom_call.1} parent=1 // pred_region
      %s443 = ssub.s32 128, 128
      %444 = vsyncadd [#allocation3], %s443
      %s446 = sshll.u32 [#allocation2], 4
      %s447 = int_to_ptr.vmem [resolvable:$true] %s446
      %449 = dma.vmem_to_hbm [thread:$0]  %s447, 128, %s5, [#allocation3]
    $region25: #{tpu_custom_call.1} parent=1 // pred_fallthru
      _
    // Predicated region
    $region26: #{tpu_custom_call.1} parent=1 // pred_check
      _
    $region27: #{tpu_custom_call.1} parent=1 // pred_check_branch
      %451 = sbr.rel (0) target = $region29
    $region28: #{tpu_custom_call.1} parent=1 // pred_region
      %452 = dma.done [#allocation3], 128
    $region29: #{tpu_custom_call.1} parent=1 // pred_fallthru
      _
    %453 = vsyncpa [#allocation3], 1

</llo_original>
